<compile_context>
chip_gen: v7x
topology: tpu7x:2x2x1
jax: 0.10.0
libtpu: 0.0.40
codegen_flags: <defaults>
</compile_context>

<pallas_src>
import functools

import jax
import jax.numpy as jnp
from jax.experimental import pallas as pl
from jax.experimental.pallas import tpu as pltpu


def _round_up(x, m):
    return ((x + m - 1) // m) * m


def _choose_tiles(batch, seq, embed, in_itemsize, budget_bytes=4 << 20):
    """Pick (Bt, Lt) so a single input tile (Bt*Lt*E*itemsize) stays under
    `budget_bytes`.  With double buffering that keeps the input DMA well inside
    the default scoped-VMEM limit on v5e (16 MiB), v6e (32 MiB) and v7x
    (32 MiB / 64 MiB physical).  Raise the budget + vmem_limit_bytes on
    v5e/v6e (128 MiB physical) if you want bigger tiles."""
    bt = min(_round_up(batch, 8), 256)
    row_bytes = max(bt * embed * in_itemsize, 1)
    max_lt = max(8, budget_bytes // row_bytes)
    if seq <= max_lt:
        lt = seq
    else:
        lt = max(8, (max_lt // 8) * 8)
    return bt, lt


def _wa2_kernel(x_ref, w1_ref, b1_ref, w2_ref, b2_ref, out_ref, acc_ref, *, inv_len):
    # x_ref:  (Bt, Lt, E)  bfloat16   -- embedded-token tile
    # w1_ref: (E, Hp)      float32    (Hp = H padded to 128-multiple)
    # b1_ref: (1, Hp)      float32
    # w2_ref: (Hp, Cp)     float32    (Cp = C padded to 128-multiple)
    # b2_ref: (1, Cp)      float32    (padded class entries are -1e30)
    # out_ref:(Bt, Cp)     float32
    # acc_ref:(Bt, E)      float32    -- running sum over the sequence axis
    l = pl.program_id(1)

    @pl.when(l == 0)
    def _():
        acc_ref[...] = jnp.zeros_like(acc_ref)

    # Sum this sequence tile in f32 (upcast bf16 before VPU/XLU work).
    acc_ref[...] += jnp.sum(x_ref[...].astype(jnp.float32), axis=1)

    @pl.when(l == pl.num_programs(1) - 1)
    def _():
        xm = acc_ref[...] * inv_len                                    # (Bt, E) mean
        h = jnp.dot(xm, w1_ref[...],
                    preferred_element_type=jnp.float32) + b1_ref[...]  # (Bt, Hp)
        h = jnp.maximum(h, 0.0)                                        # ReLU
        o = jnp.dot(h, w2_ref[...],
                    preferred_element_type=jnp.float32) + b2_ref[...]  # (Bt, Cp)
        # Numerically stable softmax over classes; padded logits are ~-1e30 -> exp==0.
        m = jnp.max(o, axis=1, keepdims=True)
        e = jnp.exp(o - m)
        s = jnp.sum(e, axis=1, keepdims=True)
        out_ref[...] = e * pl.reciprocal(s, approx=True)


def word_averaging2(token_ids, emb_table, w1, b1, w2, b2):
    """token_ids: (B, L) int32; emb_table: (V, E) f32; w1: (E, H); b1: (1, H);
    w2: (H, C); b2: (1, C).  Returns (B, C) float32 softmax probabilities."""
    B, L = token_ids.shape
    V, E = emb_table.shape
    H = w1.shape[1]
    C = w2.shape[1]

    # ---- lane-pad hidden & class dims to multiples of 128 -------------------
    Hp = _round_up(H, 128)
    Cp = _round_up(C, 128)
    w1p = jnp.pad(w1, ((0, 0), (0, Hp - H)))
    b1p = jnp.pad(b1, ((0, 0), (0, Hp - H)))
    w2p = jnp.pad(w2, ((0, Hp - H), (0, Cp - C)))
    # Padded classes must be ignored by the softmax -> very negative bias.
    b2p = jnp.pad(b2, ((0, 0), (0, Cp - C)), constant_values=-1e30)

    # ---- embedding gather in bf16 (halves the dominant HBM read) ------------
    x_emb = jnp.take(emb_table.astype(jnp.bfloat16), token_ids, axis=0)  # (B, L, E)

    # ---- tiling: batch tiles (parallel) x seq tiles (arbitrary) --------------
    Bt, Lt = _choose_tiles(B, L, E, in_itemsize=2)
    Bp = _round_up(B, Bt)
    Lp = _round_up(L, Lt)
    if (Bp, Lp) != (B, L):
        # Zero padding keeps the sequence *sum* unchanged; we divide by the
        # original L inside the kernel, so the mean is exact.
        x_emb = jnp.pad(x_emb, ((0, Bp - B), (0, Lp - L), (0, 0)))

    nb, nl = Bp // Bt, Lp // Lt
    kernel = functools.partial(_wa2_kernel, inv_len=1.0 / float(L))

    out = pl.pallas_call(
        kernel,
        out_shape=jax.ShapeDtypeStruct((Bp, Cp), jnp.float32),
        grid_spec=pltpu.PrefetchScalarGridSpec(
            num_scalar_prefetch=0,
            grid=(nb, nl),
            in_specs=[
                pl.BlockSpec((Bt, Lt, E), lambda i, l: (i, l, 0)),   # x_emb tile
                pl.BlockSpec((E, Hp), lambda i, l: (0, 0)),          # w1 (resident)
                pl.BlockSpec((1, Hp), lambda i, l: (0, 0)),          # b1 (resident)
                pl.BlockSpec((Hp, Cp), lambda i, l: (0, 0)),         # w2 (resident)
                pl.BlockSpec((1, Cp), lambda i, l: (0, 0)),          # b2 (resident)
            ],
            out_specs=pl.BlockSpec((Bt, Cp), lambda i, l: (i, 0)),
            scratch_shapes=[pltpu.VMEM((Bt, E), jnp.float32)],
        ),
        compiler_params=pltpu.CompilerParams(
            dimension_semantics=("parallel", "arbitrary")),
    )(x_emb, w1p, b1p, w2p, b2p)

    return out[:B, :C]


def init_params(key, vocab_size, embed_size, num_classes, padding_index, hidden=200):
    k_emb, k_w1, k_b1, k_w2, k_b2 = jax.random.split(key, 5)
    # nn.Embedding default init: N(0, 1); padding_idx row zeroed.
    emb = jax.random.normal(k_emb, (vocab_size, embed_size), dtype=jnp.float32)
    emb = emb.at[padding_index].set(0.0)
    # nn.Linear default init: U(-1/sqrt(fan_in), 1/sqrt(fan_in)).
    bound1 = 1.0 / jnp.sqrt(jnp.float32(embed_size))
    w1 = jax.random.uniform(k_w1, (embed_size, hidden), jnp.float32, -bound1, bound1)
    b1 = jax.random.uniform(k_b1, (1, hidden), jnp.float32, -bound1, bound1)
    bound2 = 1.0 / jnp.sqrt(jnp.float32(hidden))
    w2 = jax.random.uniform(k_w2, (hidden, num_classes), jnp.float32, -bound2, bound2)
    b2 = jax.random.uniform(k_b2, (1, num_classes), jnp.float32, -bound2, bound2)
    return emb, w1, b1, w2, b2


if __name__ == "__main__":
    vocab_size = 64
    embed_size = 32
    num_classes = 5
    padding_index = 0
    batch, seq = 2, 8

    key = jax.random.PRNGKey(0)
    k_params, k_ids = jax.random.split(key)
    emb, w1, b1, w2, b2 = init_params(
        k_params, vocab_size, embed_size, num_classes, padding_index)

    token_ids = jax.random.randint(k_ids, (batch, seq), 0, vocab_size, dtype=jnp.int32)

    out = word_averaging2(token_ids, emb, w1, b1, w2, b2)
    out = jax.block_until_ready(out)

    # Reference in plain JAX, using the same bf16-quantized embedding table the
    # kernel consumes (so the only deltas are fp accumulation order and the
    # approximate reciprocal in the softmax).
    emb_q = emb.astype(jnp.bfloat16).astype(jnp.float32)
    x_ref = jnp.mean(jnp.take(emb_q, token_ids, axis=0), axis=1)
    h_ref = jnp.maximum(x_ref @ w1 + b1, 0.0)
    o_ref = h_ref @ w2 + b2
    p_ref = jax.nn.softmax(o_ref, axis=1)

    assert out.shape == (batch, num_classes)
    assert jnp.allclose(out, p_ref, atol=2e-3, rtol=2e-3), (out, p_ref)
    assert jnp.allclose(jnp.sum(out, axis=1), 1.0, atol=2e-3)

    print("KERNEL_OK")
</pallas_src>

<mosaic_0001>
module attributes {stable_mosaic.version = 11 : i64} {
  func.func @_wa2_kernel(%arg0: i32, %arg1: i32, %arg2: memref<8x8x32xbf16, #tpu.memory_space<vmem>>, %arg3: memref<32x256xf32, #tpu.memory_space<vmem>>, %arg4: memref<1x256xf32, #tpu.memory_space<vmem>>, %arg5: memref<256x128xf32, #tpu.memory_space<vmem>>, %arg6: memref<1x128xf32, #tpu.memory_space<vmem>>, %arg7: memref<8x128xf32, #tpu.memory_space<vmem>>, %arg8: memref<8x32xf32, #tpu.memory_space<vmem>>) attributes {dimension_semantics = [#tpu.dimension_semantics<parallel>, #tpu.dimension_semantics<arbitrary>], iteration_bounds = array<i64: 1, 1>, scalar_prefetch = 0 : i64, scratch_operands = 1 : i64, tpu.core_type = #tpu.core_type<tc>, window_params = [{transform_indices = @transform_0, window_bounds = array<i64: 8, 8, 32>}, {pipeline_mode = #tpu.pipeline_mode<synchronous>, transform_indices = @transform_1, window_bounds = array<i64: 32, 256>}, {pipeline_mode = #tpu.pipeline_mode<synchronous>, transform_indices = @transform_2, window_bounds = array<i64: 1, 256>}, {pipeline_mode = #tpu.pipeline_mode<synchronous>, transform_indices = @transform_3, window_bounds = array<i64: 256, 128>}, {pipeline_mode = #tpu.pipeline_mode<synchronous>, transform_indices = @transform_4, window_bounds = array<i64: 1, 128>}, {transform_indices = @transform_5, window_bounds = array<i64: 8, 128>}]} {
    %c0_i32 = arith.constant 0 : i32
    %0 = arith.cmpi eq, %arg1, %c0_i32 : i32
    %1 = arith.extui %0 : i1 to i32
    %c0_i32_0 = arith.constant 0 : i32
    %2 = arith.cmpi ne, %1, %c0_i32_0 : i32
    scf.if %2 {
      %cst_9 = arith.constant 0.000000e+00 : f32
      %12 = vector.broadcast %cst_9 : f32 to vector<8x32xf32>
      %c0_10 = arith.constant 0 : index
      %c0_11 = arith.constant 0 : index
      %13 = vector.load %arg8[%c0_10, %c0_11] : memref<8x32xf32, #tpu.memory_space<vmem>>, vector<8x32xf32>
      tpu.vector_store %arg8[%c0_10, %c0_11], %12 {strides = array<i32>} : memref<8x32xf32, #tpu.memory_space<vmem>>, vector<8x32xf32>,
    } else {
    }
    %c0 = arith.constant 0 : index
    %c0_1 = arith.constant 0 : index
    %3 = vector.load %arg8[%c0, %c0_1] : memref<8x32xf32, #tpu.memory_space<vmem>>, vector<8x32xf32>
    %c0_2 = arith.constant 0 : index
    %c0_3 = arith.constant 0 : index
    %c0_4 = arith.constant 0 : index
    %4 = vector.load %arg2[%c0_2, %c0_3, %c0_4] : memref<8x8x32xbf16, #tpu.memory_space<vmem>>, vector<8x8x32xbf16>
    %5 = arith.extf %4 : vector<8x8x32xbf16> to vector<8x8x32xf32>
    %cst = arith.constant dense<0.000000e+00> : vector<8x32xf32>
    %6 = vector.multi_reduction <add>, %5, %cst [1] : vector<8x8x32xf32> to vector<8x32xf32>
    %7 = arith.addf %3, %6 : vector<8x32xf32>
    %c0_5 = arith.constant 0 : index
    %c0_6 = arith.constant 0 : index
    %8 = vector.load %arg8[%c0_5, %c0_6] : memref<8x32xf32, #tpu.memory_space<vmem>>, vector<8x32xf32>
    tpu.vector_store %arg8[%c0_5, %c0_6], %7 {strides = array<i32>} : memref<8x32xf32, #tpu.memory_space<vmem>>, vector<8x32xf32>,
    %c0_i32_7 = arith.constant 0 : i32
    %9 = arith.cmpi eq, %arg1, %c0_i32_7 : i32
    %10 = arith.extui %9 : i1 to i32
    %c0_i32_8 = arith.constant 0 : i32
    %11 = arith.cmpi ne, %10, %c0_i32_8 : i32
    scf.if %11 {
      %c0_9 = arith.constant 0 : index
      %c0_10 = arith.constant 0 : index
      %12 = vector.load %arg8[%c0_9, %c0_10] : memref<8x32xf32, #tpu.memory_space<vmem>>, vector<8x32xf32>
      %cst_11 = arith.constant 1.250000e-01 : f32
      %13 = vector.broadcast %cst_11 : f32 to vector<8x32xf32>
      %14 = arith.mulf %12, %13 : vector<8x32xf32>
      %c0_12 = arith.constant 0 : index
      %c0_13 = arith.constant 0 : index
      %15 = vector.load %arg3[%c0_12, %c0_13] : memref<32x256xf32, #tpu.memory_space<vmem>>, vector<32x256xf32>
      %cst_14 = arith.constant dense<0.000000e+00> : vector<8x256xf32>
      %16 = tpu.matmul %14, %15, %cst_14 {dimension_numbers = #tpu.dot_dimension_numbers<[1], [0], [0], [1], [0, 0, 1, 1], [], []>} : vector<8x32xf32>, vector<32x256xf32>, vector<8x256xf32> -> vector<8x256xf32>
      %c0_15 = arith.constant 0 : index
      %c0_16 = arith.constant 0 : index
      %17 = vector.load %arg4[%c0_15, %c0_16] : memref<1x256xf32, #tpu.memory_space<vmem>>, vector<1x256xf32>
      %18 = vector.broadcast %17 : vector<1x256xf32> to vector<8x256xf32>
      %19 = arith.addf %16, %18 : vector<8x256xf32>
      %cst_17 = arith.constant 0.000000e+00 : f32
      %20 = vector.broadcast %cst_17 : f32 to vector<8x256xf32>
      %21 = arith.maximumf %19, %20 : vector<8x256xf32>
      %c0_18 = arith.constant 0 : index
      %c0_19 = arith.constant 0 : index
      %22 = vector.load %arg5[%c0_18, %c0_19] : memref<256x128xf32, #tpu.memory_space<vmem>>, vector<256x128xf32>
      %cst_20 = arith.constant dense<0.000000e+00> : vector<8x128xf32>
      %23 = tpu.matmul %21, %22, %cst_20 {dimension_numbers = #tpu.dot_dimension_numbers<[1], [0], [0], [1], [0, 0, 1, 1], [], []>} : vector<8x256xf32>, vector<256x128xf32>, vector<8x128xf32> -> vector<8x128xf32>
      %c0_21 = arith.constant 0 : index
      %c0_22 = arith.constant 0 : index
      %24 = vector.load %arg6[%c0_21, %c0_22] : memref<1x128xf32, #tpu.memory_space<vmem>>, vector<1x128xf32>
      %25 = vector.broadcast %24 : vector<1x128xf32> to vector<8x128xf32>
      %26 = arith.addf %23, %25 : vector<8x128xf32>
      %cst_23 = arith.constant dense<0xFF800000> : vector<8xf32>
      %27 = vector.multi_reduction <maximumf>, %26, %cst_23 [1] : vector<8x128xf32> to vector<8xf32>
      %28 = vector.shape_cast %27 : vector<8xf32> to vector<8x1xf32>
      %29 = vector.broadcast %28 : vector<8x1xf32> to vector<8x128xf32>
      %30 = arith.subf %26, %29 : vector<8x128xf32>
      %31 = math.exp %30 : vector<8x128xf32>
      %cst_24 = arith.constant dense<0.000000e+00> : vector<8xf32>
      %32 = vector.multi_reduction <add>, %31, %cst_24 [1] : vector<8x128xf32> to vector<8xf32>
      %33 = vector.shape_cast %32 : vector<8xf32> to vector<8x1xf32>
      %34 = tpu.reciprocal %33 {approx = true} : vector<8x1xf32> -> vector<8x1xf32>
      %35 = vector.broadcast %34 : vector<8x1xf32> to vector<8x128xf32>
      %36 = arith.mulf %31, %35 : vector<8x128xf32>
      %c0_25 = arith.constant 0 : index
      %c0_26 = arith.constant 0 : index
      %37 = vector.load %arg7[%c0_25, %c0_26] : memref<8x128xf32, #tpu.memory_space<vmem>>, vector<8x128xf32>
      tpu.vector_store %arg7[%c0_25, %c0_26], %36 {strides = array<i32>} : memref<8x128xf32, #tpu.memory_space<vmem>>, vector<8x128xf32>,
    } else {
    }
    return
  }
  func.func @transform_0(%arg0: i32, %arg1: i32) -> (i32, i32, i32) {
    %c0_i32 = arith.constant 0 : i32
    %c0_i32_0 = arith.constant 0 : i32
    return %arg0, %arg1, %c0_i32 : i32, i32, i32
  }
  func.func @transform_1(%arg0: i32, %arg1: i32) -> (i32, i32) {
    %c0_i32 = arith.constant 0 : i32
    %c0_i32_0 = arith.constant 0 : i32
    %c0_i32_1 = arith.constant 0 : i32
    return %c0_i32, %c0_i32_0 : i32, i32
  }
  func.func @transform_2(%arg0: i32, %arg1: i32) -> (i32, i32) {
    %c0_i32 = arith.constant 0 : i32
    %c0_i32_0 = arith.constant 0 : i32
    %c0_i32_1 = arith.constant 0 : i32
    return %c0_i32, %c0_i32_0 : i32, i32
  }
  func.func @transform_3(%arg0: i32, %arg1: i32) -> (i32, i32) {
    %c0_i32 = arith.constant 0 : i32
    %c0_i32_0 = arith.constant 0 : i32
    %c0_i32_1 = arith.constant 0 : i32
    return %c0_i32, %c0_i32_0 : i32, i32
  }
  func.func @transform_4(%arg0: i32, %arg1: i32) -> (i32, i32) {
    %c0_i32 = arith.constant 0 : i32
    %c0_i32_0 = arith.constant 0 : i32
    %c0_i32_1 = arith.constant 0 : i32
    return %c0_i32, %c0_i32_0 : i32, i32
  }
  func.func @transform_5(%arg0: i32, %arg1: i32) -> (i32, i32) {
    %c0_i32 = arith.constant 0 : i32
    %c0_i32_0 = arith.constant 0 : i32
    return %arg0, %c0_i32 : i32, i32
  }
}

</mosaic_0001>

<llo_original>
// kernel: tpu_custom_call.1
$region0: #{tpu_custom_call.1}
  #allocation0 [shape = 'u32[]', space=smem, size = 0x4, offset = 0x4, fixed_abs, tag = 'smem constant byte address 0x4 - core index']
  #allocation1 [shape = 'u32[144,128]{1,0:T(1,128)}', space=vmem, size = 0x12000, scoped, tag = 'internal scratch']
  #allocation2 [shape = 'f32[8,32]{1,0:T(8,128)}', space=vmem, size = 0x1000, scoped, tag = 'scratch operand']
  %s0 = inlined_call_operand.hbm [shape: bf16[8,8,32], index: 0, kind: input, shape index: {}]
  %s1 = inlined_call_operand.hbm [shape: f32[32,256], index: 1, kind: input, shape index: {}]
  %s2 = inlined_call_operand.vmem [shape: f32[1,256], index: 2, kind: input, shape index: {}]
  %s3 = inlined_call_operand.hbm [shape: f32[256,128], index: 3, kind: input, shape index: {}]
  %s4 = inlined_call_operand.vmem [shape: f32[1,128], index: 4, kind: input, shape index: {}]
  %s5 = inlined_call_operand.hbm [shape: f32[8,128], index: 5, kind: output, shape index: {}]
  %s6 = sld [smem:[#allocation0]]
  $region50: #{tpu_custom_call.1} parent=0
    _
  %s8 = ssub.s32 1, %s6
  %s9 = scalar_select 0, %s8, %s6
  $region1: #{tpu_custom_call.1} parent=0
    #allocation3 [shape = 'u8[16384]{0}', space=vmem, size = 0x4000, scoped, tag = 'input window, operand 0, single buffered']
    #allocation4 [shape = 's32[1]{0}', space=sflag, size = 0x4, scoped, tag = 'scoped memory for tpu_custom_call.1']
    #allocation5 [shape = 's32[1]{0}', space=sflag, size = 0x4, scoped, tag = 'scoped memory for tpu_custom_call.1']
    #allocation6 [shape = 'u8[32768]{0}', space=vmem, size = 0x8000, scoped, tag = 'input window, operand 1, single buffered']
    #allocation7 [shape = 's32[1]{0}', space=sflag, size = 0x4, scoped, tag = 'scoped memory for tpu_custom_call.1']
    #allocation8 [shape = 'u8[131072]{0}', space=vmem, size = 0x20000, scoped, tag = 'input window, operand 3, single buffered']
    #allocation9 [shape = 'u8[4096]{0}', space=vmem, size = 0x1000, scoped, tag = 'output window, operand 0, single buffered']
    %10 = vsyncpa [#allocation4], 0
    %11 = vsyncpa [#allocation7], 0
    %12 = vsyncpa [#allocation5], 0
    // Predicated region
    $region2: #{tpu_custom_call.1} parent=1 // pred_check
      _
    $region3: #{tpu_custom_call.1} parent=1 // pred_check_branch
      %14 = sbr.rel (0) target = $region5
    $region4: #{tpu_custom_call.1} parent=1 // pred_region
      %s16 = ssub.s32 512, 512
      %17 = vsyncadd [#allocation4], %s16
      %s18 = sshll.u32 [#allocation3], 4
      %s19 = int_to_ptr.vmem [resolvable:$true] %s18
      %24 = dma.hbm_to_vmem [thread:$0]  %s0, 512, %s19, [#allocation4], 64, 64, 4
    $region5: #{tpu_custom_call.1} parent=1 // pred_fallthru
      _
    // Predicated region
    $region6: #{tpu_custom_call.1} parent=1 // pred_check
      _
    $region7: #{tpu_custom_call.1} parent=1 // pred_check_branch
      %26 = sbr.rel (0) target = $region9
    $region8: #{tpu_custom_call.1} parent=1 // pred_region
      %s28 = ssub.s32 1024, 1024
      %29 = vsyncadd [#allocation7], %s28
      %s30 = sshll.u32 [#allocation6], 4
      %s31 = int_to_ptr.vmem [resolvable:$true] %s30
      %36 = dma.hbm_to_vmem [thread:$0]  %s1, 1024, %s31, [#allocation7], 256, 256, 16
    $region9: #{tpu_custom_call.1} parent=1 // pred_fallthru
      _
    // Predicated region
    $region10: #{tpu_custom_call.1} parent=1 // pred_check
      _
    $region11: #{tpu_custom_call.1} parent=1 // pred_check_branch
      %38 = sbr.rel (0) target = $region13
    $region12: #{tpu_custom_call.1} parent=1 // pred_region
      _
    $region13: #{tpu_custom_call.1} parent=1 // pred_fallthru
      _
    // Predicated region
    $region14: #{tpu_custom_call.1} parent=1 // pred_check
      _
    $region15: #{tpu_custom_call.1} parent=1 // pred_check_branch
      %40 = sbr.rel (0) target = $region17
    $region16: #{tpu_custom_call.1} parent=1 // pred_region
      %s42 = ssub.s32 4096, 4096
      %43 = vsyncadd [#allocation7], %s42
      %s44 = sshll.u32 [#allocation8], 4
      %s45 = int_to_ptr.vmem [resolvable:$true] %s44
      %50 = dma.hbm_to_vmem [thread:$0]  %s3, 4096, %s45, [#allocation7], 128, 128, 8
    $region17: #{tpu_custom_call.1} parent=1 // pred_fallthru
      _
    // Predicated region
    $region18: #{tpu_custom_call.1} parent=1 // pred_check
      _
    $region19: #{tpu_custom_call.1} parent=1 // pred_check_branch
      %52 = sbr.rel (0) target = $region21
    $region20: #{tpu_custom_call.1} parent=1 // pred_region
      _
    $region21: #{tpu_custom_call.1} parent=1 // pred_fallthru
      _
    // Predicated region
    $region22: #{tpu_custom_call.1} parent=1 // pred_check
      _
    $region23: #{tpu_custom_call.1} parent=1 // pred_check_branch
      %54 = sbr.rel (0) target = $region25
    $region24: #{tpu_custom_call.1} parent=1 // pred_region
      %55 = dma.done [#allocation4], 512
    $region25: #{tpu_custom_call.1} parent=1 // pred_fallthru
      _
    // Predicated region
    $region26: #{tpu_custom_call.1} parent=1 // pred_check
      _
    $region27: #{tpu_custom_call.1} parent=1 // pred_check_branch
      %57 = sbr.rel (0) target = $region29
    $region28: #{tpu_custom_call.1} parent=1 // pred_region
      %58 = dma.done [#allocation7], 1024
    $region29: #{tpu_custom_call.1} parent=1 // pred_fallthru
      _
    // Predicated region
    $region30: #{tpu_custom_call.1} parent=1 // pred_check
      _
    $region31: #{tpu_custom_call.1} parent=1 // pred_check_branch
      %60 = sbr.rel (0) target = $region33
    $region32: #{tpu_custom_call.1} parent=1 // pred_region
      %61 = dma.done [#allocation7], 4096
    $region33: #{tpu_custom_call.1} parent=1 // pred_fallthru
      _
    %p62 = scmp.eq.s32.totalorder 0, 0
    // Predicated region
    $region34: #{tpu_custom_call.1} parent=1 // pred_check
      %p63 = pneg %p62
    $region35: #{tpu_custom_call.1} parent=1 // pred_check_branch
      %65 = sbr.rel (%p63) target = $region37
    $region36: #{tpu_custom_call.1} parent=1 // pred_region
      %vm66 = vcmask 261120
      %67 = vst.msk [vmem:[#allocation2] sm:$0xff] %vm66, 0.0
    $region37: #{tpu_custom_call.1} parent=1 // pred_fallthru
      _
    %v68 = vld [vmem:[#allocation2] sm:$0xff]
    %v69 = vld [vmem:[#allocation3] sm:$0xf]
    %v70 = vld [vmem:[#allocation3 + $0x4] sm:$0xf]
    %v71 = vld [vmem:[#allocation3 + $0x8] sm:$0xf]
    %v72 = vld [vmem:[#allocation3 + $0xc] sm:$0xf]
    %v73 = vld [vmem:[#allocation3 + $0x10] sm:$0xf]
    %v74 = vld [vmem:[#allocation3 + $0x14] sm:$0xf]
    %v75 = vld [vmem:[#allocation3 + $0x18] sm:$0xf]
    %v76 = vld [vmem:[#allocation3 + $0x1c] sm:$0xf]
    %v77 = vunpack.c.l.bf16 %v69
    %v78 = vunpack.c.l.bf16 %v70
    %v79 = vunpack.c.l.bf16 %v71
    %v80 = vunpack.c.l.bf16 %v72
    %v81 = vunpack.c.l.bf16 %v73
    %v82 = vunpack.c.l.bf16 %v74
    %v83 = vunpack.c.l.bf16 %v75
    %v84 = vunpack.c.l.bf16 %v76
    %vm85 = vcmask 261120
    %v86 = vsel %vm85, %v77, 0.0
    %v87 = vrot.slane %v86, 4
    %v88 = vadd.f32 %v86, %v87
    %v89 = vrot.slane %v88, 2
    %v90 = vadd.f32 %v88, %v89
    %v91 = vrot.slane %v90, 1
    %v92 = vadd.f32 %v90, %v91
    %v93 = vsel %vm85, %v78, 0.0
    %v94 = vrot.slane %v93, 4
    %v95 = vadd.f32 %v93, %v94
    %v96 = vrot.slane %v95, 2
    %v97 = vadd.f32 %v95, %v96
    %v98 = vrot.slane %v97, 1
    %v99 = vadd.f32 %v97, %v98
    %v100 = vsel %vm85, %v79, 0.0
    %v101 = vrot.slane %v100, 4
    %v102 = vadd.f32 %v100, %v101
    %v103 = vrot.slane %v102, 2
    %v104 = vadd.f32 %v102, %v103
    %v105 = vrot.slane %v104, 1
    %v106 = vadd.f32 %v104, %v105
    %v107 = vsel %vm85, %v80, 0.0
    %v108 = vrot.slane %v107, 4
    %v109 = vadd.f32 %v107, %v108
    %v110 = vrot.slane %v109, 2
    %v111 = vadd.f32 %v109, %v110
    %v112 = vrot.slane %v111, 1
    %v113 = vadd.f32 %v111, %v112
    %v114 = vsel %vm85, %v81, 0.0
    %v115 = vrot.slane %v114, 4
    %v116 = vadd.f32 %v114, %v115
    %v117 = vrot.slane %v116, 2
    %v118 = vadd.f32 %v116, %v117
    %v119 = vrot.slane %v118, 1
    %v120 = vadd.f32 %v118, %v119
    %v121 = vsel %vm85, %v82, 0.0
    %v122 = vrot.slane %v121, 4
    %v123 = vadd.f32 %v121, %v122
    %v124 = vrot.slane %v123, 2
    %v125 = vadd.f32 %v123, %v124
    %v126 = vrot.slane %v125, 1
    %v127 = vadd.f32 %v125, %v126
    %v128 = vsel %vm85, %v83, 0.0
    %v129 = vrot.slane %v128, 4
    %v130 = vadd.f32 %v128, %v129
    %v131 = vrot.slane %v130, 2
    %v132 = vadd.f32 %v130, %v131
    %v133 = vrot.slane %v132, 1
    %v134 = vadd.f32 %v132, %v133
    %v135 = vsel %vm85, %v84, 0.0
    %v136 = vrot.slane %v135, 4
    %v137 = vadd.f32 %v135, %v136
    %v138 = vrot.slane %v137, 2
    %v139 = vadd.f32 %v137, %v138
    %v140 = vrot.slane %v139, 1
    %v141 = vadd.f32 %v139, %v140
    %vm150 = vcmask 1041409
    %v151 = vsel %vm150, %v99, %v92
    %vm152 = vcmask 1042434
    %v153 = vsel %vm152, %v106, %v151
    %vm154 = vcmask 1043459
    %v155 = vsel %vm154, %v113, %v153
    %vm156 = vcmask 1044484
    %v157 = vsel %vm156, %v120, %v155
    %vm158 = vcmask 1045509
    %v159 = vsel %vm158, %v127, %v157
    %vm160 = vcmask 1046534
    %v161 = vsel %vm160, %v134, %v159
    %vm162 = vcmask 1047559
    %v163 = vsel %vm162, %v141, %v161
    %v165 = vadd.f32 %v68, %v163
    %166 = vst.msk [vmem:[#allocation2] sm:$0xff] %vm85, %v165
    // Predicated region
    $region38: #{tpu_custom_call.1} parent=1 // pred_check
      %p167 = pneg %p62
    $region39: #{tpu_custom_call.1} parent=1 // pred_check_branch
      %169 = sbr.rel (%p167) target = $region41
    $region40: #{tpu_custom_call.1} parent=1 // pred_region
      %v170 = vld [vmem:[#allocation2] sm:$0xff]
      %v171 = vmul.f32 %v170, 0.125
      %v172 = vld [vmem:[#allocation6] sm:$0xff]
      %v173 = vld [vmem:[#allocation6 + $0x8] sm:$0xff]
      %v174 = vld [vmem:[#allocation6 + $0x10] sm:$0xff]
      %v175 = vld [vmem:[#allocation6 + $0x18] sm:$0xff]
      %v176 = vld [vmem:[#allocation6 + $0x20] sm:$0xff]
      %v177 = vld [vmem:[#allocation6 + $0x28] sm:$0xff]
      %v178 = vld [vmem:[#allocation6 + $0x30] sm:$0xff]
      %v179 = vld [vmem:[#allocation6 + $0x38] sm:$0xff]
      %v180 = vld [vmem:[%s2] sm:$0x3]
      %v182 = vlaneseq
      %v183 = vshrl.u32 %v182, 7
      %v184 = vsub.s32 0, %v183
      %v185 = vrot.slane %v180, %v184
      %v186 = vlaneseq
      %v187 = vshrl.u32 %v186, 7
      %v188 = vsub.s32 1, %v187
      %v189 = vrot.slane %v180, %v188
      %v193 = vsel %vm85, %v171, 0
      %195 = vmatprep.subr.mxu0 %v173
      %196 = vmatpush1.msra.mxu0 %v172
      %197 = vmatprep.subr.mxu0 %v175
      %198 = vmatpush1.msra.mxu0 %v174
      %199 = vmatprep.subr.mxu0 %v177
      %200 = vmatpush1.msra.mxu0 %v176
      %201 = vmatprep.subr.mxu0 %v179
      %202 = vmatpush1.msra.mxu0 %v178
      %203 = vmatprep.subr.mxu0 0.0
      %204 = vmatpush1.msra.mxu0 0.0
      %205 = vmatprep.subr.mxu0 0.0
      %206 = vmatpush1.msra.mxu0 0.0
      %207 = vmatprep.subr.mxu0 0.0
      %208 = vmatpush1.msra.mxu0 0.0
      %209 = vmatprep.subr.mxu0 0.0
      %210 = vmatpush1.msra.mxu0 0.0
      %211 = vmatprep.subr.mxu0 0.0
      %212 = vmatpush1.msra.mxu0 0.0
      %213 = vmatprep.subr.mxu0 0.0
      %214 = vmatpush1.msra.mxu0 0.0
      %215 = vmatprep.subr.mxu0 0.0
      %216 = vmatpush1.msra.mxu0 0.0
      %217 = vmatprep.subr.mxu0 0.0
      %218 = vmatpush1.msra.mxu0 0.0
      %219 = vmatprep.subr.mxu0 0.0
      %220 = vmatpush1.msra.mxu0 0.0
      %221 = vmatprep.subr.mxu0 0.0
      %222 = vmatpush1.msra.mxu0 0.0
      %223 = vmatprep.subr.mxu0 0.0
      %224 = vmatpush1.msra.mxu0 0.0
      %225 = vmatprep.subr.mxu0 0.0
      %226 = vmatpush1.msra.mxu0 0.0
      %227 = vmatprep.subr.mxu0 0.0
      %228 = vmatpush1.msra.mxu0 0.0
      %229 = vmatprep.subr.mxu0 0.0
      %230 = vmatpush1.msra.mxu0 0.0
      %231 = vmatprep.subr.mxu0 0.0
      %232 = vmatpush1.msra.mxu0 0.0
      %233 = vmatprep.subr.mxu0 0.0
      %234 = vmatpush1.msra.mxu0 0.0
      %235 = vmatprep.subr.mxu0 0.0
      %236 = vmatpush1.msra.mxu0 0.0
      %237 = vmatprep.subr.mxu0 0.0
      %238 = vmatpush1.msra.mxu0 0.0
      %239 = vmatprep.subr.mxu0 0.0
      %240 = vmatpush1.msra.mxu0 0.0
      %241 = vmatprep.subr.mxu0 0.0
      %242 = vmatpush1.msra.mxu0 0.0
      %243 = vmatprep.subr.mxu0 0.0
      %244 = vmatpush1.msra.mxu0 0.0
      %245 = vmatprep.subr.mxu0 0.0
      %246 = vmatpush1.msra.mxu0 0.0
      %247 = vmatprep.subr.mxu0 0.0
      %248 = vmatpush1.msra.mxu0 0.0
      %249 = vmatprep.subr.mxu0 0.0
      %250 = vmatpush1.msra.mxu0 0.0
      %251 = vmatprep.subr.mxu0 0.0
      %252 = vmatpush1.msra.mxu0 0.0
      %253 = vmatprep.subr.mxu0 0.0
      %254 = vmatpush1.msra.mxu0 0.0
      %255 = vmatprep.subr.mxu0 0.0
      %256 = vmatpush1.msra.mxu0 0.0
      %257 = vmatprep.subr.mxu0 0.0
      %258 = vmatpush1.msra.mxu0 0.0
      %259 = vmatprep.mubr.f32.mxu0 0.0
      %260 = vmatmul.mubr.f32.gmra.mrb[0].mxu0 %v193
      %v261 = vpop.f32.mrb[0].mxu0
      %v262 = vadd.f32 %v185, %v261
      %v263 = vpop.f32.mrb[0].mxu0
      %v264 = vadd.f32 %v189, %v263
      %265 = vdwg.mxu0
      %v266 = vmax.f32 %v262, 0.0
      %v267 = vmax.f32 %v264, 0.0
      %v268 = vld [vmem:[#allocation8] sm:$0xff]
      %v269 = vld [vmem:[#allocation8 + $0x8] sm:$0xff]
      %v270 = vld [vmem:[#allocation8 + $0x10] sm:$0xff]
      %v271 = vld [vmem:[#allocation8 + $0x18] sm:$0xff]
      %v272 = vld [vmem:[#allocation8 + $0x20] sm:$0xff]
      %v273 = vld [vmem:[#allocation8 + $0x28] sm:$0xff]
      %v274 = vld [vmem:[#allocation8 + $0x30] sm:$0xff]
      %v275 = vld [vmem:[#allocation8 + $0x38] sm:$0xff]
      %v276 = vld [vmem:[#allocation8 + $0x40] sm:$0xff]
      %v277 = vld [vmem:[#allocation8 + $0x48] sm:$0xff]
      %v278 = vld [vmem:[#allocation8 + $0x50] sm:$0xff]
      %v279 = vld [vmem:[#allocation8 + $0x58] sm:$0xff]
      %v280 = vld [vmem:[#allocation8 + $0x60] sm:$0xff]
      %v281 = vld [vmem:[#allocation8 + $0x68] sm:$0xff]
      %v282 = vld [vmem:[#allocation8 + $0x70] sm:$0xff]
      %v283 = vld [vmem:[#allocation8 + $0x78] sm:$0xff]
      %v284 = vld [vmem:[#allocation8 + $0x80] sm:$0xff]
      %v285 = vld [vmem:[#allocation8 + $0x88] sm:$0xff]
      %v286 = vld [vmem:[#allocation8 + $0x90] sm:$0xff]
      %v287 = vld [vmem:[#allocation8 + $0x98] sm:$0xff]
      %v288 = vld [vmem:[#allocation8 + $0xa0] sm:$0xff]
      %v289 = vld [vmem:[#allocation8 + $0xa8] sm:$0xff]
      %v290 = vld [vmem:[#allocation8 + $0xb0] sm:$0xff]
      %v291 = vld [vmem:[#allocation8 + $0xb8] sm:$0xff]
      %v292 = vld [vmem:[#allocation8 + $0xc0] sm:$0xff]
      %v293 = vld [vmem:[#allocation8 + $0xc8] sm:$0xff]
      %v294 = vld [vmem:[#allocation8 + $0xd0] sm:$0xff]
      %v295 = vld [vmem:[#allocation8 + $0xd8] sm:$0xff]
      %v296 = vld [vmem:[#allocation8 + $0xe0] sm:$0xff]
      %v297 = vld [vmem:[#allocation8 + $0xe8] sm:$0xff]
      %v298 = vld [vmem:[#allocation8 + $0xf0] sm:$0xff]
      %v299 = vld [vmem:[#allocation8 + $0xf8] sm:$0xff]
      %v300 = vld [vmem:[%s4] sm:$0x1]
      %v302 = vlaneseq
      %v303 = vshrl.u32 %v302, 7
      %v304 = vsub.s32 0, %v303
      %v305 = vrot.slane %v300, %v304
      %307 = vmatprep.subr.mxu0 0.0
      %308 = vmatpush1.msra.mxu0 %v268
      %309 = vmatprep.subr.mxu0 0.0
      %310 = vmatpush1.msra.mxu0 %v269
      %311 = vmatprep.subr.mxu0 0.0
      %312 = vmatpush1.msra.mxu0 %v270
      %313 = vmatprep.subr.mxu0 0.0
      %314 = vmatpush1.msra.mxu0 %v271
      %315 = vmatprep.subr.mxu0 0.0
      %316 = vmatpush1.msra.mxu0 %v272
      %317 = vmatprep.subr.mxu0 0.0
      %318 = vmatpush1.msra.mxu0 %v273
      %319 = vmatprep.subr.mxu0 0.0
      %320 = vmatpush1.msra.mxu0 %v274
      %321 = vmatprep.subr.mxu0 0.0
      %322 = vmatpush1.msra.mxu0 %v275
      %323 = vmatprep.subr.mxu0 0.0
      %324 = vmatpush1.msra.mxu0 %v276
      %325 = vmatprep.subr.mxu0 0.0
      %326 = vmatpush1.msra.mxu0 %v277
      %327 = vmatprep.subr.mxu0 0.0
      %328 = vmatpush1.msra.mxu0 %v278
      %329 = vmatprep.subr.mxu0 0.0
      %330 = vmatpush1.msra.mxu0 %v279
      %331 = vmatprep.subr.mxu0 0.0
      %332 = vmatpush1.msra.mxu0 %v280
      %333 = vmatprep.subr.mxu0 0.0
      %334 = vmatpush1.msra.mxu0 %v281
      %335 = vmatprep.subr.mxu0 0.0
      %336 = vmatpush1.msra.mxu0 %v282
      %337 = vmatprep.subr.mxu0 0.0
      %338 = vmatpush1.msra.mxu0 %v283
      %339 = vmatprep.subr.mxu0 0.0
      %340 = vmatpush1.msra.mxu0 %v284
      %341 = vmatprep.subr.mxu0 0.0
      %342 = vmatpush1.msra.mxu0 %v285
      %343 = vmatprep.subr.mxu0 0.0
      %344 = vmatpush1.msra.mxu0 %v286
      %345 = vmatprep.subr.mxu0 0.0
      %346 = vmatpush1.msra.mxu0 %v287
      %347 = vmatprep.subr.mxu0 0.0
      %348 = vmatpush1.msra.mxu0 %v288
      %349 = vmatprep.subr.mxu0 0.0
      %350 = vmatpush1.msra.mxu0 %v289
      %351 = vmatprep.subr.mxu0 0.0
      %352 = vmatpush1.msra.mxu0 %v290
      %353 = vmatprep.subr.mxu0 0.0
      %354 = vmatpush1.msra.mxu0 %v291
      %355 = vmatprep.subr.mxu0 0.0
      %356 = vmatpush1.msra.mxu0 %v292
      %357 = vmatprep.subr.mxu0 0.0
      %358 = vmatpush1.msra.mxu0 %v293
      %359 = vmatprep.subr.mxu0 0.0
      %360 = vmatpush1.msra.mxu0 %v294
      %361 = vmatprep.subr.mxu0 0.0
      %362 = vmatpush1.msra.mxu0 %v295
      %363 = vmatprep.subr.mxu0 0.0
      %364 = vmatpush1.msra.mxu0 %v296
      %365 = vmatprep.subr.mxu0 0.0
      %366 = vmatpush1.msra.mxu0 %v297
      %367 = vmatprep.subr.mxu0 0.0
      %368 = vmatpush1.msra.mxu0 %v298
      %369 = vmatprep.subr.mxu0 0.0
      %370 = vmatpush1.msra.mxu0 %v299
      %371 = vmatprep.mubr.f32.mxu0 %v267
      %372 = vmatmul.mubr.f32.gmra.mrb[0].mxu0 %v266
      %v373 = vpop.f32.mrb[0].mxu0
      %v374 = vadd.f32 %v305, %v373
      %v375 = vpop.f32.mrb[0].mxu0
      %376 = vdwg.mxu0
      %377 = vmax.xlane.f32.xlu0 %v374
      %v378 = vpop.xlane.xlu0 %377
      %v379 = vsub.f32 %v374, %v378
      %v380 = vmul.f32 %v379, 1.442695
      %v381 = vpow.pop %v380
      %382 = vadd.xlane.f32.xlu0 %v381
      %v383 = vpop.xlane.xlu0 %382
      %v384 = vrcp.pop %v383
      %v385 = vmul.f32 %v381, %v384
      %386 = vst [vmem:[#allocation9] sm:$0xff] %v385
    $region41: #{tpu_custom_call.1} parent=1 // pred_fallthru
      _
    // Predicated region
    $region42: #{tpu_custom_call.1} parent=1 // pred_check
      _
    $region43: #{tpu_custom_call.1} parent=1 // pred_check_branch
      %388 = sbr.rel (0) target = $region45
    $region44: #{tpu_custom_call.1} parent=1 // pred_region
      %s390 = ssub.s32 128, 128
      %391 = vsyncadd [#allocation5], %s390
      %s393 = sshll.u32 [#allocation9], 4
      %s394 = int_to_ptr.vmem [resolvable:$true] %s393
      %396 = dma.vmem_to_hbm [thread:$0]  %s394, 128, %s5, [#allocation5]
    $region45: #{tpu_custom_call.1} parent=1 // pred_fallthru
      _
    // Predicated region
    $region46: #{tpu_custom_call.1} parent=1 // pred_check
      _
    $region47: #{tpu_custom_call.1} parent=1 // pred_check_branch
      %398 = sbr.rel (0) target = $region49
    $region48: #{tpu_custom_call.1} parent=1 // pred_region
      %399 = dma.done [#allocation5], 128
    $region49: #{tpu_custom_call.1} parent=1 // pred_fallthru
      _
    %400 = vsyncpa [#allocation4], 1
    %401 = vsyncpa [#allocation7], 1
    %402 = vsyncpa [#allocation5], 1

</llo_original>
